<compile_context>
chip_gen: v7x
topology: tpu7x:2x2x1
jax: 0.10.0
libtpu: 0.0.40
codegen_flags: <defaults>
</compile_context>

<pallas_src>
import functools

import jax
import jax.numpy as jnp
from jax import lax
from jax.experimental import pallas as pl
from jax.experimental.pallas import tpu as pltpu


# ----------------------------- helpers --------------------------------------


def _round_up(x, m):
    return (x + m - 1) // m * m


def _padded_lane_bytes(rows, itemsize):
    """Bytes per lane column of a (rows, lanes) buffer, honoring (8*pack,128) tiling."""
    sublane = 8 * max(1, 4 // int(itemsize))      # f32 -> 8, bf16 -> 16, i8 -> 32
    return _round_up(rows, sublane) * int(itemsize)


def _vmem_capacity_bytes():
    try:
        info = pltpu.get_tpu_info()
        for attr in ("vmem_capacity_bytes", "vmem_bytes", "vmem_size_bytes"):
            v = getattr(info, attr, None)
            if v:
                return int(v)
    except Exception:
        pass
    return 64 << 20                                # conservative: v7x-sized VMEM


def _pick_spatial_tile(hw, per_lane_bytes, tile_budget_bytes):
    """Largest lane-dense spatial tile that fits the per-tile VMEM budget."""
    cap = max(128, (tile_budget_bytes // max(1, per_lane_bytes)) // 128 * 128)
    if hw <= cap:
        return hw                                  # full spatial extent in one tile
    t = cap
    while t >= 128:
        if hw % t == 0:
            return t                               # 128-multiple that divides hw
        t -= 128
    return cap                                     # no divisor: cdiv grid + lane mask


# ----------------------------- kernels --------------------------------------


def _fused_kernel(x1_ref, x2_ref, w1_ref, w2_ref, b_ref, gb_ref, o_ref,
                  y_sc, sum_sc, sq_sc, *, hw, thw, inv_m, eps, needs_mask):
    p = pl.program_id(0)
    n = pl.program_id(1)
    t = pl.program_id(2)

    @pl.when((p == 0) & (n == 0) & (t == 0))
    def _():
        sum_sc[...] = jnp.zeros_like(sum_sc)
        sq_sc[...] = jnp.zeros_like(sq_sc)

    @pl.when(p == 0)
    def _():
        # 1x1 conv of the (virtually concatenated) input; f32 MXU accumulation.
        y = (jnp.dot(w1_ref[...], x1_ref[...], preferred_element_type=jnp.float32)
             + jnp.dot(w2_ref[...], x2_ref[...], preferred_element_type=jnp.float32)
             + b_ref[...])
        y_sc[n, t] = y                              # keep y resident in VMEM
        if needs_mask:
            lane = lax.broadcasted_iota(jnp.int32, y.shape, 1)
            y = jnp.where(lane < (hw - t * thw), y, 0.0)
        sum_sc[...] += jnp.sum(y, axis=1, keepdims=True)
        sq_sc[...] += jnp.sum(y * y, axis=1, keepdims=True)

    @pl.when(p == 1)
    def _():
        mean = sum_sc[...] * inv_m
        var = sq_sc[...] * inv_m - mean * mean      # biased (training-mode) variance
        scale = gb_ref[0] * lax.rsqrt(var + eps)    # gamma / sqrt(var + eps)
        shift = gb_ref[1] - mean * scale            # beta - mean * scale
        y = y_sc[n, t]
        o_ref[...] = jnp.maximum(y * scale + shift, 0.0).astype(o_ref.dtype)


def _stats_kernel(x1_ref, x2_ref, w1_ref, w2_ref, b_ref, sum_ref, sq_ref,
                  *, hw, thw, needs_mask):
    t = pl.program_id(1)
    y = (jnp.dot(w1_ref[...], x1_ref[...], preferred_element_type=jnp.float32)
         + jnp.dot(w2_ref[...], x2_ref[...], preferred_element_type=jnp.float32)
         + b_ref[...])
    if needs_mask:
        lane = lax.broadcasted_iota(jnp.int32, y.shape, 1)
        y = jnp.where(lane < (hw - t * thw), y, 0.0)
    sum_ref[...] = jnp.sum(y, axis=1, keepdims=True)
    sq_ref[...] = jnp.sum(y * y, axis=1, keepdims=True)


def _bn_relu_kernel(x1_ref, x2_ref, w1_ref, w2_ref, b_ref, o_ref):
    # Cheap K=C conv with BN already folded into w/b, then ReLU.
    y = (jnp.dot(w1_ref[...], x1_ref[...], preferred_element_type=jnp.float32)
         + jnp.dot(w2_ref[...], x2_ref[...], preferred_element_type=jnp.float32)
         + b_ref[...])
    o_ref[...] = jnp.maximum(y, 0.0).astype(o_ref.dtype)


# ----------------------------- wrapper --------------------------------------


def context_switching_block(image_feat, other_feat, w, b, gamma, beta, eps=1e-5):
    """image_feat/other_feat: (N, C, H, W).  w: (2C, Cout), b/gamma/beta: (Cout,)."""
    N, C, H, W = image_feat.shape
    Cout = w.shape[1]
    HW = H * W
    M = N * HW

    in_dtype = image_feat.dtype
    out_dtype = in_dtype

    # Free reshapes (contiguous); NO concat, NO transpose, NO upcast of the big tensors.
    x1 = image_feat.reshape(N, C, HW)
    x2 = other_feat.reshape(N, C, HW)

    # Tiny parameters: split / transpose the 1x1-conv weight into two (Cout, C) halves.
    w_f32 = w.astype(jnp.float32)
    w1 = jnp.transpose(w_f32[:C, :]).astype(in_dtype)   # (Cout, C)
    w2 = jnp.transpose(w_f32[C:, :]).astype(in_dtype)   # (Cout, C)
    b_f32 = b.astype(jnp.float32)
    b2 = b_f32.reshape(Cout, 1)
    gb = jnp.stack([gamma.astype(jnp.float32),
                    beta.astype(jnp.float32)]).reshape(2, Cout, 1)

    # ---- per-generation VMEM budgeting (sublane-padded accounting) ----
    itemsize = jnp.dtype(in_dtype).itemsize
    x_col = _padded_lane_bytes(C, itemsize)       # one x input buffer, per lane
    yo_col = _padded_lane_bytes(Cout, 4)          # f32 y / out column, per lane
    # 2 inputs x 2 double-buffers + 2 output buffers + f32 y temp headroom.
    per_lane = 4 * x_col + 2 * yo_col + 2 * yo_col

    cap = _vmem_capacity_bytes()
    budget = (40 << 20) if cap <= (64 << 20) else (64 << 20)   # v7x vs v5e/v6e
    vmem_limit = int(min(budget * 1.25, cap * 0.9))

    y_resident = N * _round_up(Cout, 8) * _round_up(HW, 512) * 4

    if y_resident <= budget // 2:
        # ---------------- fused single pass: x read from HBM exactly once ----
        thw = _pick_spatial_tile(HW, per_lane, budget - y_resident)
        T = pl.cdiv(HW, thw)
        needs_mask = (HW % thw) != 0

        x_spec = pl.BlockSpec(
            (None, C, thw),
            lambda p, n, t: (n * (1 - p) + (N - 1) * p, 0, t * (1 - p) + (T - 1) * p))
        w_spec = pl.BlockSpec((Cout, C), lambda p, n, t: (0, 0))
        b_spec = pl.BlockSpec((Cout, 1), lambda p, n, t: (0, 0))
        gb_spec = pl.BlockSpec((2, Cout, 1), lambda p, n, t: (0, 0, 0))
        o_spec = pl.BlockSpec((None, Cout, thw), lambda p, n, t: (n * p, 0, t * p))

        kernel = functools.partial(_fused_kernel, hw=HW, thw=thw,
                                   inv_m=1.0 / float(M), eps=float(eps),
                                   needs_mask=needs_mask)
        out = pl.pallas_call(
            kernel,
            out_shape=jax.ShapeDtypeStruct((N, Cout, HW), out_dtype),
            grid_spec=pltpu.PrefetchScalarGridSpec(
                num_scalar_prefetch=0,
                grid=(2, N, T),
                in_specs=[x_spec, x_spec, w_spec, w_spec, b_spec, gb_spec],
                out_specs=o_spec,
                scratch_shapes=[pltpu.VMEM((N, T, Cout, thw), jnp.float32),
                                pltpu.VMEM((Cout, 1), jnp.float32),
                                pltpu.VMEM((Cout, 1), jnp.float32)]),
            compiler_params=pltpu.CompilerParams(
                dimension_semantics=("arbitrary", "arbitrary", "arbitrary"),
                vmem_limit_bytes=vmem_limit),
        )(x1, x2, w1, w2, b2, gb)
        return out.reshape(N, Cout, H, W)

    # -------------------- fallback: two passes over x --------------------
    thw = _pick_spatial_tile(HW, per_lane, budget)
    T = pl.cdiv(HW, thw)
    needs_mask = (HW % thw) != 0

    x_spec = pl.BlockSpec((None, C, thw), lambda n, t: (n, 0, t))
    w_spec = pl.BlockSpec((Cout, C), lambda n, t: (0, 0))
    b_spec = pl.BlockSpec((Cout, 1), lambda n, t: (0, 0))
    stat_spec = pl.BlockSpec((None, None, Cout, 1), lambda n, t: (n, t, 0, 0))

    # Pass 1: per-(n,t) partial stats (no y written to HBM; fully parallel grid).
    stats_kernel = functools.partial(_stats_kernel, hw=HW, thw=thw,
                                     needs_mask=needs_mask)
    sum_p, sq_p = pl.pallas_call(
        stats_kernel,
        out_shape=(jax.ShapeDtypeStruct((N, T, Cout, 1), jnp.float32),
                   jax.ShapeDtypeStruct((N, T, Cout, 1), jnp.float32)),
        grid_spec=pltpu.PrefetchScalarGridSpec(
            num_scalar_prefetch=0,
            grid=(N, T),
            in_specs=[x_spec, x_spec, w_spec, w_spec, b_spec],
            out_specs=(stat_spec, stat_spec)),
        compiler_params=pltpu.CompilerParams(
            dimension_semantics=("parallel", "parallel"),
            vmem_limit_bytes=vmem_limit),
    )(x1, x2, w1, w2, b2)

    # BatchNorm (training-mode, biased batch stats) folded into conv weights.
    s = jnp.sum(sum_p[..., 0], axis=(0, 1))          # (Cout,)
    ss = jnp.sum(sq_p[..., 0], axis=(0, 1))          # (Cout,)
    mean = s / M
    var = ss / M - mean * mean
    scale = gamma.astype(jnp.float32) * lax.rsqrt(var + eps)
    shift = beta.astype(jnp.float32) - mean * scale
    w1f = (w1.astype(jnp.float32) * scale[:, None]).astype(in_dtype)
    w2f = (w2.astype(jnp.float32) * scale[:, None]).astype(in_dtype)
    bf = (b_f32 * scale + shift).reshape(Cout, 1)

    # Pass 2: fused conv + folded-BN + ReLU, lane-dense output.
    out = pl.pallas_call(
        _bn_relu_kernel,
        out_shape=jax.ShapeDtypeStruct((N, Cout, HW), out_dtype),
        grid_spec=pltpu.PrefetchScalarGridSpec(
            num_scalar_prefetch=0,
            grid=(N, T),
            in_specs=[x_spec, x_spec, w_spec, w_spec, b_spec],
            out_specs=pl.BlockSpec((None, Cout, thw), lambda n, t: (n, 0, t))),
        compiler_params=pltpu.CompilerParams(
            dimension_semantics=("parallel", "parallel"),
            vmem_limit_bytes=vmem_limit),
    )(x1, x2, w1f, w2f, bf)
    return out.reshape(N, Cout, H, W)


# ----------------------------- reference ------------------------------------


def reference(image_feat, other_feat, w, b, gamma, beta, eps=1e-5):
    """Plain-JAX reference of the torch forward (training-mode BN)."""
    x = jnp.concatenate([image_feat, other_feat], axis=1)           # (N, 2C, H, W)
    y = jnp.einsum('nchw,cd->ndhw', x, w) + b[None, :, None, None]  # 1x1 conv
    mean = jnp.mean(y, axis=(0, 2, 3), keepdims=True)
    var = jnp.mean((y - mean) ** 2, axis=(0, 2, 3), keepdims=True)  # biased var
    yn = (y - mean) / jnp.sqrt(var + eps)
    return jnp.maximum(yn * gamma[None, :, None, None] + beta[None, :, None, None], 0.0)


if __name__ == "__main__":
    # Small shapes consistent with the module: in_channels=4, out_channels=8.
    N, C_in, H, W = 2, 4, 16, 16
    C_out = 8
    Cin2 = 2 * C_in

    key = jax.random.PRNGKey(0)
    k_img, k_oth, k_w, k_b = jax.random.split(key, 4)

    image_feat = jax.random.normal(k_img, (N, C_in, H, W), dtype=jnp.float32)
    other_feat = jax.random.normal(k_oth, (N, C_in, H, W), dtype=jnp.float32)

    # Conv2d(kernel_size=1) params (PyTorch-style fan_in-bounded uniform init),
    # stored as (2*C_in, C_out).
    bound = 1.0 / (Cin2 ** 0.5)
    w = jax.random.uniform(k_w, (Cin2, C_out), minval=-bound, maxval=bound,
                           dtype=jnp.float32)
    b = jax.random.uniform(k_b, (C_out,), minval=-bound, maxval=bound,
                           dtype=jnp.float32)
    # BatchNorm2d affine params (PyTorch default init).
    gamma = jnp.ones((C_out,), dtype=jnp.float32)
    beta = jnp.zeros((C_out,), dtype=jnp.float32)

    out = context_switching_block(image_feat, other_feat, w, b, gamma, beta)
    out = jax.block_until_ready(out)

    ref = reference(image_feat, other_feat, w, b, gamma, beta)
    assert out.shape == (N, C_out, H, W)
    assert jnp.allclose(out, ref, rtol=1e-2, atol=1e-2)

    print("KERNEL_OK")
</pallas_src>

<mosaic_0001>
module attributes {stable_mosaic.version = 11 : i64} {
  func.func @_fused_kernel(%arg0: i32, %arg1: i32, %arg2: i32, %arg3: memref<1x4x256xf32, #tpu.memory_space<vmem>>, %arg4: memref<1x4x256xf32, #tpu.memory_space<vmem>>, %arg5: memref<8x4xf32, #tpu.memory_space<vmem>>, %arg6: memref<8x4xf32, #tpu.memory_space<vmem>>, %arg7: memref<8x1xf32, #tpu.memory_space<vmem>>, %arg8: memref<2x8x1xf32, #tpu.memory_space<vmem>>, %arg9: memref<1x8x256xf32, #tpu.memory_space<vmem>>, %arg10: memref<2x1x8x256xf32, #tpu.memory_space<vmem>>, %arg11: memref<8x1xf32, #tpu.memory_space<vmem>>, %arg12: memref<8x1xf32, #tpu.memory_space<vmem>>) attributes {dimension_semantics = [#tpu.dimension_semantics<arbitrary>, #tpu.dimension_semantics<arbitrary>, #tpu.dimension_semantics<arbitrary>], iteration_bounds = array<i64: 2, 2, 1>, scalar_prefetch = 0 : i64, scratch_operands = 3 : i64, tpu.core_type = #tpu.core_type<tc>, window_params = [{transform_indices = @transform_0, window_bounds = array<i64: 1, 4, 256>}, {transform_indices = @transform_1, window_bounds = array<i64: 1, 4, 256>}, {pipeline_mode = #tpu.pipeline_mode<synchronous>, transform_indices = @transform_2, window_bounds = array<i64: 8, 4>}, {pipeline_mode = #tpu.pipeline_mode<synchronous>, transform_indices = @transform_3, window_bounds = array<i64: 8, 4>}, {pipeline_mode = #tpu.pipeline_mode<synchronous>, transform_indices = @transform_4, window_bounds = array<i64: 8, 1>}, {pipeline_mode = #tpu.pipeline_mode<synchronous>, transform_indices = @transform_5, window_bounds = array<i64: 2, 8, 1>}, {transform_indices = @transform_6, window_bounds = array<i64: 1, 8, 256>}]} {
    %c0_i32 = arith.constant 0 : i32
    %0 = arith.cmpi eq, %arg0, %c0_i32 : i32
    %c0_i32_0 = arith.constant 0 : i32
    %1 = arith.cmpi eq, %arg1, %c0_i32_0 : i32
    %2 = arith.andi %0, %1 : i1
    %c0_i32_1 = arith.constant 0 : i32
    %3 = arith.cmpi eq, %arg2, %c0_i32_1 : i32
    %4 = arith.andi %2, %3 : i1
    %5 = arith.extui %4 : i1 to i32
    %c0_i32_2 = arith.constant 0 : i32
    %6 = arith.cmpi ne, %5, %c0_i32_2 : i32
    scf.if %6 {
      %cst = arith.constant 0.000000e+00 : f32
      %13 = vector.broadcast %cst : f32 to vector<8x1xf32>
      %c0 = arith.constant 0 : index
      %c0_6 = arith.constant 0 : index
      %14 = vector.load %arg11[%c0, %c0_6] : memref<8x1xf32, #tpu.memory_space<vmem>>, vector<8x1xf32>
      tpu.vector_store %arg11[%c0, %c0_6], %13 {strides = array<i32>} : memref<8x1xf32, #tpu.memory_space<vmem>>, vector<8x1xf32>,
      %cst_7 = arith.constant 0.000000e+00 : f32
      %15 = vector.broadcast %cst_7 : f32 to vector<8x1xf32>
      %c0_8 = arith.constant 0 : index
      %c0_9 = arith.constant 0 : index
      %16 = vector.load %arg12[%c0_8, %c0_9] : memref<8x1xf32, #tpu.memory_space<vmem>>, vector<8x1xf32>
      tpu.vector_store %arg12[%c0_8, %c0_9], %15 {strides = array<i32>} : memref<8x1xf32, #tpu.memory_space<vmem>>, vector<8x1xf32>,
    } else {
    }
    %c0_i32_3 = arith.constant 0 : i32
    %7 = arith.cmpi eq, %arg0, %c0_i32_3 : i32
    %8 = arith.extui %7 : i1 to i32
    %c0_i32_4 = arith.constant 0 : i32
    %9 = arith.cmpi ne, %8, %c0_i32_4 : i32
    scf.if %9 {
      %c0 = arith.constant 0 : index
      %c0_6 = arith.constant 0 : index
      %13 = vector.load %arg5[%c0, %c0_6] : memref<8x4xf32, #tpu.memory_space<vmem>>, vector<8x4xf32>
      %c0_7 = arith.constant 0 : index
      %c0_8 = arith.constant 0 : index
      %c0_9 = arith.constant 0 : index
      %14 = vector.load %arg3[%c0_7, %c0_8, %c0_9] : memref<1x4x256xf32, #tpu.memory_space<vmem>>, vector<1x4x256xf32>
      %15 = vector.shape_cast %14 : vector<1x4x256xf32> to vector<4x256xf32>
      %cst = arith.constant dense<0.000000e+00> : vector<8x256xf32>
      %16 = tpu.matmul %13, %15, %cst {dimension_numbers = #tpu.dot_dimension_numbers<[1], [0], [0], [1], [0, 0, 1, 1], [], []>} : vector<8x4xf32>, vector<4x256xf32>, vector<8x256xf32> -> vector<8x256xf32>
      %c0_10 = arith.constant 0 : index
      %c0_11 = arith.constant 0 : index
      %17 = vector.load %arg6[%c0_10, %c0_11] : memref<8x4xf32, #tpu.memory_space<vmem>>, vector<8x4xf32>
      %c0_12 = arith.constant 0 : index
      %c0_13 = arith.constant 0 : index
      %c0_14 = arith.constant 0 : index
      %18 = vector.load %arg4[%c0_12, %c0_13, %c0_14] : memref<1x4x256xf32, #tpu.memory_space<vmem>>, vector<1x4x256xf32>
      %19 = vector.shape_cast %18 : vector<1x4x256xf32> to vector<4x256xf32>
      %cst_15 = arith.constant dense<0.000000e+00> : vector<8x256xf32>
      %20 = tpu.matmul %17, %19, %cst_15 {dimension_numbers = #tpu.dot_dimension_numbers<[1], [0], [0], [1], [0, 0, 1, 1], [], []>} : vector<8x4xf32>, vector<4x256xf32>, vector<8x256xf32> -> vector<8x256xf32>
      %21 = arith.addf %16, %20 : vector<8x256xf32>
      %c0_16 = arith.constant 0 : index
      %c0_17 = arith.constant 0 : index
      %22 = vector.load %arg7[%c0_16, %c0_17] : memref<8x1xf32, #tpu.memory_space<vmem>>, vector<8x1xf32>
      %23 = vector.broadcast %22 : vector<8x1xf32> to vector<8x256xf32>
      %24 = arith.addf %21, %23 : vector<8x256xf32>
      %25 = arith.index_cast %arg1 : i32 to index
      %26 = arith.index_cast %arg2 : i32 to index
      %c0_18 = arith.constant 0 : index
      %c0_19 = arith.constant 0 : index
      %27 = vector.load %arg10[%25, %26, %c0_18, %c0_19] : memref<2x1x8x256xf32, #tpu.memory_space<vmem>>, vector<1x1x8x256xf32>
      %28 = vector.shape_cast %27 : vector<1x1x8x256xf32> to vector<8x256xf32>
      %29 = vector.shape_cast %24 : vector<8x256xf32> to vector<1x1x8x256xf32>
      tpu.vector_store %arg10[%25, %26, %c0_18, %c0_19], %29 {strides = array<i32>} : memref<2x1x8x256xf32, #tpu.memory_space<vmem>>, vector<1x1x8x256xf32>,
      %c0_20 = arith.constant 0 : index
      %c0_21 = arith.constant 0 : index
      %30 = vector.load %arg11[%c0_20, %c0_21] : memref<8x1xf32, #tpu.memory_space<vmem>>, vector<8x1xf32>
      %cst_22 = arith.constant dense<0.000000e+00> : vector<8xf32>
      %31 = vector.multi_reduction <add>, %24, %cst_22 [1] : vector<8x256xf32> to vector<8xf32>
      %32 = vector.shape_cast %31 : vector<8xf32> to vector<8x1xf32>
      %33 = arith.addf %30, %32 : vector<8x1xf32>
      %c0_23 = arith.constant 0 : index
      %c0_24 = arith.constant 0 : index
      %34 = vector.load %arg11[%c0_23, %c0_24] : memref<8x1xf32, #tpu.memory_space<vmem>>, vector<8x1xf32>
      tpu.vector_store %arg11[%c0_23, %c0_24], %33 {strides = array<i32>} : memref<8x1xf32, #tpu.memory_space<vmem>>, vector<8x1xf32>,
      %c0_25 = arith.constant 0 : index
      %c0_26 = arith.constant 0 : index
      %35 = vector.load %arg12[%c0_25, %c0_26] : memref<8x1xf32, #tpu.memory_space<vmem>>, vector<8x1xf32>
      %36 = arith.mulf %24, %24 : vector<8x256xf32>
      %cst_27 = arith.constant dense<0.000000e+00> : vector<8xf32>
      %37 = vector.multi_reduction <add>, %36, %cst_27 [1] : vector<8x256xf32> to vector<8xf32>
      %38 = vector.shape_cast %37 : vector<8xf32> to vector<8x1xf32>
      %39 = arith.addf %35, %38 : vector<8x1xf32>
      %c0_28 = arith.constant 0 : index
      %c0_29 = arith.constant 0 : index
      %40 = vector.load %arg12[%c0_28, %c0_29] : memref<8x1xf32, #tpu.memory_space<vmem>>, vector<8x1xf32>
      tpu.vector_store %arg12[%c0_28, %c0_29], %39 {strides = array<i32>} : memref<8x1xf32, #tpu.memory_space<vmem>>, vector<8x1xf32>,
    } else {
    }
    %c1_i32 = arith.constant 1 : i32
    %10 = arith.cmpi eq, %arg0, %c1_i32 : i32
    %11 = arith.extui %10 : i1 to i32
    %c0_i32_5 = arith.constant 0 : i32
    %12 = arith.cmpi ne, %11, %c0_i32_5 : i32
    scf.if %12 {
      %c0 = arith.constant 0 : index
      %c0_6 = arith.constant 0 : index
      %13 = vector.load %arg11[%c0, %c0_6] : memref<8x1xf32, #tpu.memory_space<vmem>>, vector<8x1xf32>
      %cst = arith.constant 0.001953125 : f32
      %14 = vector.broadcast %cst : f32 to vector<8x1xf32>
      %15 = arith.mulf %13, %14 : vector<8x1xf32>
      %c0_7 = arith.constant 0 : index
      %c0_8 = arith.constant 0 : index
      %16 = vector.load %arg12[%c0_7, %c0_8] : memref<8x1xf32, #tpu.memory_space<vmem>>, vector<8x1xf32>
      %cst_9 = arith.constant 0.001953125 : f32
      %17 = vector.broadcast %cst_9 : f32 to vector<8x1xf32>
      %18 = arith.mulf %16, %17 : vector<8x1xf32>
      %19 = arith.mulf %15, %15 : vector<8x1xf32>
      %20 = arith.subf %18, %19 : vector<8x1xf32>
      %c0_10 = arith.constant 0 : index
      %c0_11 = arith.constant 0 : index
      %c0_12 = arith.constant 0 : index
      %21 = vector.load %arg8[%c0_10, %c0_11, %c0_12] : memref<2x8x1xf32, #tpu.memory_space<vmem>>, vector<1x8x1xf32>
      %22 = vector.shape_cast %21 : vector<1x8x1xf32> to vector<8x1xf32>
      %cst_13 = arith.constant 9.99999974E-6 : f32
      %23 = vector.broadcast %cst_13 : f32 to vector<8x1xf32>
      %24 = arith.addf %20, %23 : vector<8x1xf32>
      %25 = math.rsqrt %24 : vector<8x1xf32>
      %26 = arith.mulf %22, %25 : vector<8x1xf32>
      %c1 = arith.constant 1 : index
      %c0_14 = arith.constant 0 : index
      %c0_15 = arith.constant 0 : index
      %27 = vector.load %arg8[%c1, %c0_14, %c0_15] : memref<2x8x1xf32, #tpu.memory_space<vmem>>, vector<1x8x1xf32>
      %28 = vector.shape_cast %27 : vector<1x8x1xf32> to vector<8x1xf32>
      %29 = arith.mulf %15, %26 : vector<8x1xf32>
      %30 = arith.subf %28, %29 : vector<8x1xf32>
      %31 = arith.index_cast %arg1 : i32 to index
      %32 = arith.index_cast %arg2 : i32 to index
      %c0_16 = arith.constant 0 : index
      %c0_17 = arith.constant 0 : index
      %33 = vector.load %arg10[%31, %32, %c0_16, %c0_17] : memref<2x1x8x256xf32, #tpu.memory_space<vmem>>, vector<1x1x8x256xf32>
      %34 = vector.shape_cast %33 : vector<1x1x8x256xf32> to vector<8x256xf32>
      %35 = vector.broadcast %26 : vector<8x1xf32> to vector<8x256xf32>
      %36 = arith.mulf %34, %35 : vector<8x256xf32>
      %37 = vector.broadcast %30 : vector<8x1xf32> to vector<8x256xf32>
      %38 = arith.addf %36, %37 : vector<8x256xf32>
      %cst_18 = arith.constant 0.000000e+00 : f32
      %39 = vector.broadcast %cst_18 : f32 to vector<8x256xf32>
      %40 = arith.maximumf %38, %39 : vector<8x256xf32>
      %c0_19 = arith.constant 0 : index
      %c0_20 = arith.constant 0 : index
      %c0_21 = arith.constant 0 : index
      %41 = vector.load %arg9[%c0_19, %c0_20, %c0_21] : memref<1x8x256xf32, #tpu.memory_space<vmem>>, vector<1x8x256xf32>
      %42 = vector.shape_cast %41 : vector<1x8x256xf32> to vector<8x256xf32>
      %43 = vector.shape_cast %40 : vector<8x256xf32> to vector<1x8x256xf32>
      tpu.vector_store %arg9[%c0_19, %c0_20, %c0_21], %43 {strides = array<i32>} : memref<1x8x256xf32, #tpu.memory_space<vmem>>, vector<1x8x256xf32>,
    } else {
    }
    return
  }
  func.func @transform_0(%arg0: i32, %arg1: i32, %arg2: i32) -> (i32, i32, i32) {
    %c1_i32 = arith.constant 1 : i32
    %0 = arith.subi %c1_i32, %arg0 : i32
    %1 = arith.muli %arg1, %0 : i32
    %c1_i32_0 = arith.constant 1 : i32
    %2 = arith.muli %c1_i32_0, %arg0 : i32
    %3 = arith.addi %1, %2 : i32
    %c1_i32_1 = arith.constant 1 : i32
    %4 = arith.subi %c1_i32_1, %arg0 : i32
    %5 = arith.muli %arg2, %4 : i32
    %c0_i32 = arith.constant 0 : i32
    %6 = arith.muli %c0_i32, %arg0 : i32
    %7 = arith.addi %5, %6 : i32
    %c0_i32_2 = arith.constant 0 : i32
    %c0_i32_3 = arith.constant 0 : i32
    return %3, %c0_i32_2, %7 : i32, i32, i32
  }
  func.func @transform_1(%arg0: i32, %arg1: i32, %arg2: i32) -> (i32, i32, i32) {
    %c1_i32 = arith.constant 1 : i32
    %0 = arith.subi %c1_i32, %arg0 : i32
    %1 = arith.muli %arg1, %0 : i32
    %c1_i32_0 = arith.constant 1 : i32
    %2 = arith.muli %c1_i32_0, %arg0 : i32
    %3 = arith.addi %1, %2 : i32
    %c1_i32_1 = arith.constant 1 : i32
    %4 = arith.subi %c1_i32_1, %arg0 : i32
    %5 = arith.muli %arg2, %4 : i32
    %c0_i32 = arith.constant 0 : i32
    %6 = arith.muli %c0_i32, %arg0 : i32
    %7 = arith.addi %5, %6 : i32
    %c0_i32_2 = arith.constant 0 : i32
    %c0_i32_3 = arith.constant 0 : i32
    return %3, %c0_i32_2, %7 : i32, i32, i32
  }
  func.func @transform_2(%arg0: i32, %arg1: i32, %arg2: i32) -> (i32, i32) {
    %c0_i32 = arith.constant 0 : i32
    %c0_i32_0 = arith.constant 0 : i32
    %c0_i32_1 = arith.constant 0 : i32
    return %c0_i32, %c0_i32_0 : i32, i32
  }
  func.func @transform_3(%arg0: i32, %arg1: i32, %arg2: i32) -> (i32, i32) {
    %c0_i32 = arith.constant 0 : i32
    %c0_i32_0 = arith.constant 0 : i32
    %c0_i32_1 = arith.constant 0 : i32
    return %c0_i32, %c0_i32_0 : i32, i32
  }
  func.func @transform_4(%arg0: i32, %arg1: i32, %arg2: i32) -> (i32, i32) {
    %c0_i32 = arith.constant 0 : i32
    %c0_i32_0 = arith.constant 0 : i32
    %c0_i32_1 = arith.constant 0 : i32
    return %c0_i32, %c0_i32_0 : i32, i32
  }
  func.func @transform_5(%arg0: i32, %arg1: i32, %arg2: i32) -> (i32, i32, i32) {
    %c0_i32 = arith.constant 0 : i32
    %c0_i32_0 = arith.constant 0 : i32
    %c0_i32_1 = arith.constant 0 : i32
    %c0_i32_2 = arith.constant 0 : i32
    return %c0_i32, %c0_i32_0, %c0_i32_1 : i32, i32, i32
  }
  func.func @transform_6(%arg0: i32, %arg1: i32, %arg2: i32) -> (i32, i32, i32) {
    %0 = arith.muli %arg1, %arg0 : i32
    %1 = arith.muli %arg2, %arg0 : i32
    %c0_i32 = arith.constant 0 : i32
    %c0_i32_0 = arith.constant 0 : i32
    return %0, %c0_i32, %1 : i32, i32, i32
  }
}

</mosaic_0001>

<llo_original>
// kernel: tpu_custom_call.1
$region0: #{tpu_custom_call.1}
  #allocation0 [shape = 'u32[]', space=smem, size = 0x4, offset = 0x4, fixed_abs, tag = 'smem constant byte address 0x4 - core index']
  #allocation1 [shape = 'u32[144,128]{1,0:T(1,128)}', space=vmem, size = 0x12000, scoped, tag = 'internal scratch']
  #allocation2 [shape = 'f32[2,1,8,256]{3,2,1,0:T(8,128)}', space=vmem, size = 0x4000, scoped, tag = 'scratch operand']
  #allocation3 [shape = 'f32[8,1]{1,0:T(8,128)}', space=vmem, size = 0x1000, scoped, tag = 'scratch operand']
  #allocation4 [shape = 'f32[8,1]{1,0:T(8,128)}', space=vmem, size = 0x1000, scoped, tag = 'scratch operand']
  %s0 = inlined_call_operand.vmem [shape: f32[2,4,256], index: 0, kind: input, shape index: {}]
  %s1 = inlined_call_operand.vmem [shape: f32[2,4,256], index: 1, kind: input, shape index: {}]
  %s2 = inlined_call_operand.vmem [shape: f32[8,4], index: 2, kind: input, shape index: {}]
  %s3 = inlined_call_operand.vmem [shape: f32[8,4], index: 3, kind: input, shape index: {}]
  %s4 = inlined_call_operand.vmem [shape: f32[8,1], index: 4, kind: input, shape index: {}]
  %s5 = inlined_call_operand.vmem [shape: f32[2,8,1], index: 5, kind: input, shape index: {}]
  %s6 = inlined_call_operand.hbm [shape: f32[2,8,256], index: 6, kind: output, shape index: {}]
  %s7 = sld [smem:[#allocation0]]
  $region69: #{tpu_custom_call.1} parent=0
    _
  %s9 = ssub.s32 1, %s7
  %s10 = scalar_select 0, %s9, %s7
  $region1: #{tpu_custom_call.1} parent=0
    #allocation5 [shape = 'u8[16384]{0}', space=vmem, size = 0x4000, scoped, tag = 'output window, operand 0']
    #allocation6 [shape = 's32[2]{0}', space=sflag, size = 0x8, scoped, tag = 'scoped memory for tpu_custom_call.1']
    %11 = vsyncpa [#allocation6], 0
    %s12 = scalar_lea.sflag [#allocation6], 1
    %13 = vsyncpa %s12, 0
    loop: start=0, step=1, limit=6
    $region2: #{tpu_custom_call.1} parent=1 // loop_pre_header
      _
    $region3: #{tpu_custom_call.1} parent=1 // loop_header
      %s15 = sphi 0, %s19
      %p16 = scmp.ge.s32.totalorder %s15, 6
      %s22 = sphi 0, %s41
      %s23 = sphi 0, %s37
      %s24 = sphi 0, %s33
      %s25 = sphi 0, %s22
      %s26 = sphi 0, %s23
      %s27 = sphi 0, %s24
      %s28 = sphi 0, %s25
      %s29 = sphi 0, %s26
      %s30 = sphi 0, %s27
      %s54 = sphi 0, %s56
      %s57 = sphi 0, %s54
      %s58 = sphi 0, %s57
      %s74 = sphi 0, %s58
      %s90 = sphi 0, %s92
      %s93 = sphi 0, %s90
      %s94 = sphi 0, %s93
      %s110 = sphi 0, %s94
      %s114 = sphi 0, %s114
      %s116 = sphi 0, %s114
      %s117 = sphi 0, %s116
      %s131 = sphi 0, %s117
      %s135 = sphi 0, %s135
      %s137 = sphi 0, %s135
      %s138 = sphi 0, %s137
      %s152 = sphi 0, %s138
      %s156 = sphi 0, %s156
      %s158 = sphi 0, %s156
      %s159 = sphi 0, %s158
      %s173 = sphi 0, %s159
      %s177 = sphi 0, %s177
      %s179 = sphi 0, %s177
      %s180 = sphi 0, %s179
      %s194 = sphi 0, %s180
      %s206 = sphi 0, %s208
      %s209 = sphi 0, %s206
      %s210 = sphi 0, %s209
      %s226 = sphi 0, %s210
    $region4: #{tpu_custom_call.1} parent=1 // loop_header_branch
      %18 = sbr.rel (%p16) target = $region8
    $region5: #{tpu_custom_call.1} parent=1 // loop_body
      %s20 = ssub.s32 %s15, 1
      %s21 = ssub.s32 %s15, 2
      %s31 = sadd.s32 1, %s24
      %p32 = scmp.ge.s32.totalorder %s31, 1
      %s33 = scalar_select %p32, 0, %s31
      %s34 = sadd.s32 1, %s23
      %s35 = scalar_select %p32, %s34, %s23
      %p36 = scmp.ge.s32.totalorder %s35, 2
      %s37 = scalar_select %p36, 0, %s35
      %s38 = sadd.s32 1, %s22
      %s39 = scalar_select %p36, %s38, %s22
      %p40 = scmp.ge.s32.totalorder %s39, 2
      %s41 = scalar_select %p40, 0, %s39
      %s42 = ssub.s32 1, %s22
      %s43 = smul.u32 %s23, %s42
      %s44 = sadd.s32 %s43, %s22
      %s45 = smul.u32 %s24, %s42
      %s46 = ssub.s32 1, %s41
      %s47 = smul.u32 %s37, %s46
      %s48 = sadd.s32 %s47, %s41
      %s49 = smul.u32 %s33, %s46
      %s50 = ssub.s32 %s44, %s48
      %s51 = ssub.s32 %s45, %s49
      %s52 = sor.u32 %s50, %s51
      %p53 = scmp.eq.s32.totalorder %s52, 0
      %s55 = sadd.s32 %s54, 1
      %s56 = scalar_select %p53, %s54, %s55
      %p59 = pneg %p53
      %p60 = scmp.eq.s32.totalorder %s15, 3
      %p61 = por %p59, %p60
      %p62 = scmp.ne.s32.totalorder %s54, %s57
      %p63 = scmp.eq.s32.totalorder %s15, 0
      %p64 = por %p62, %p63
      %p65 = scmp.ne.s32.totalorder %s54, %s57
      %p66 = scmp.eq.s32.totalorder %s20, 3
      %p67 = por %p65, %p66
      %p68 = scmp.ne.s32.totalorder %s57, %s58
      %p69 = scmp.eq.s32.totalorder %s20, 0
      %p70 = por %p68, %p69
      %p71 = scmp.ne.s32.totalorder %s57, %s58
      %p72 = scmp.eq.s32.totalorder %s21, 3
      %p73 = por %p71, %p72
      %p75 = scmp.ne.s32.totalorder %s58, %s74
      %p76 = scmp.eq.s32.totalorder %s21, 0
      %p77 = por %p75, %p76
      %s78 = ssub.s32 1, %s22
      %s79 = smul.u32 %s23, %s78
      %s80 = sadd.s32 %s79, %s22
      %s81 = smul.u32 %s24, %s78
      %s82 = ssub.s32 1, %s41
      %s83 = smul.u32 %s37, %s82
      %s84 = sadd.s32 %s83, %s41
      %s85 = smul.u32 %s33, %s82
      %s86 = ssub.s32 %s80, %s84
      %s87 = ssub.s32 %s81, %s85
      %s88 = sor.u32 %s86, %s87
      %p89 = scmp.eq.s32.totalorder %s88, 0
      %s91 = sadd.s32 %s90, 1
      %s92 = scalar_select %p89, %s90, %s91
      %p95 = pneg %p89
      %p96 = scmp.eq.s32.totalorder %s15, 3
      %p97 = por %p95, %p96
      %p98 = scmp.ne.s32.totalorder %s90, %s93
      %p99 = scmp.eq.s32.totalorder %s15, 0
      %p100 = por %p98, %p99
      %p101 = scmp.ne.s32.totalorder %s90, %s93
      %p102 = scmp.eq.s32.totalorder %s20, 3
      %p103 = por %p101, %p102
      %p104 = scmp.ne.s32.totalorder %s93, %s94
      %p105 = scmp.eq.s32.totalorder %s20, 0
      %p106 = por %p104, %p105
      %p107 = scmp.ne.s32.totalorder %s93, %s94
      %p108 = scmp.eq.s32.totalorder %s21, 3
      %p109 = por %p107, %p108
      %p111 = scmp.ne.s32.totalorder %s94, %s110
      %p112 = scmp.eq.s32.totalorder %s21, 0
      %p113 = por %p111, %p112
      %s115 = sadd.s32 %s114, 1
      %p118 = scmp.eq.s32.totalorder %s15, 3
      %p119 = scmp.ne.s32.totalorder %s114, %s116
      %p120 = scmp.eq.s32.totalorder %s15, 0
      %p121 = por %p119, %p120
      %p122 = scmp.ne.s32.totalorder %s114, %s116
      %p123 = scmp.eq.s32.totalorder %s20, 3
      %p124 = por %p122, %p123
      %p125 = scmp.ne.s32.totalorder %s116, %s117
      %p126 = scmp.eq.s32.totalorder %s20, 0
      %p127 = por %p125, %p126
      %p128 = scmp.ne.s32.totalorder %s116, %s117
      %p129 = scmp.eq.s32.totalorder %s21, 3
      %p130 = por %p128, %p129
      %p132 = scmp.ne.s32.totalorder %s117, %s131
      %p133 = scmp.eq.s32.totalorder %s21, 0
      %p134 = por %p132, %p133
      %s136 = sadd.s32 %s135, 1
      %p139 = scmp.eq.s32.totalorder %s15, 3
      %p140 = scmp.ne.s32.totalorder %s135, %s137
      %p141 = scmp.eq.s32.totalorder %s15, 0
      %p142 = por %p140, %p141
      %p143 = scmp.ne.s32.totalorder %s135, %s137
      %p144 = scmp.eq.s32.totalorder %s20, 3
      %p145 = por %p143, %p144
      %p146 = scmp.ne.s32.totalorder %s137, %s138
      %p147 = scmp.eq.s32.totalorder %s20, 0
      %p148 = por %p146, %p147
      %p149 = scmp.ne.s32.totalorder %s137, %s138
      %p150 = scmp.eq.s32.totalorder %s21, 3
      %p151 = por %p149, %p150
      %p153 = scmp.ne.s32.totalorder %s138, %s152
      %p154 = scmp.eq.s32.totalorder %s21, 0
      %p155 = por %p153, %p154
      %s157 = sadd.s32 %s156, 1
      %p160 = scmp.eq.s32.totalorder %s15, 3
      %p161 = scmp.ne.s32.totalorder %s156, %s158
      %p162 = scmp.eq.s32.totalorder %s15, 0
      %p163 = por %p161, %p162
      %p164 = scmp.ne.s32.totalorder %s156, %s158
      %p165 = scmp.eq.s32.totalorder %s20, 3
      %p166 = por %p164, %p165
      %p167 = scmp.ne.s32.totalorder %s158, %s159
      %p168 = scmp.eq.s32.totalorder %s20, 0
      %p169 = por %p167, %p168
      %p170 = scmp.ne.s32.totalorder %s158, %s159
      %p171 = scmp.eq.s32.totalorder %s21, 3
      %p172 = por %p170, %p171
      %p174 = scmp.ne.s32.totalorder %s159, %s173
      %p175 = scmp.eq.s32.totalorder %s21, 0
      %p176 = por %p174, %p175
      %s178 = sadd.s32 %s177, 1
      %p181 = scmp.eq.s32.totalorder %s15, 3
      %p182 = scmp.ne.s32.totalorder %s177, %s179
      %p183 = scmp.eq.s32.totalorder %s15, 0
      %p184 = por %p182, %p183
      %p185 = scmp.ne.s32.totalorder %s177, %s179
      %p186 = scmp.eq.s32.totalorder %s20, 3
      %p187 = por %p185, %p186
      %p188 = scmp.ne.s32.totalorder %s179, %s180
      %p189 = scmp.eq.s32.totalorder %s20, 0
      %p190 = por %p188, %p189
      %p191 = scmp.ne.s32.totalorder %s179, %s180
      %p192 = scmp.eq.s32.totalorder %s21, 3
      %p193 = por %p191, %p192
      %p195 = scmp.ne.s32.totalorder %s180, %s194
      %p196 = scmp.eq.s32.totalorder %s21, 0
      %p197 = por %p195, %p196
      %s198 = smul.u32 %s23, %s22
      %s199 = smul.u32 %s24, %s22
      %s200 = smul.u32 %s37, %s41
      %s201 = smul.u32 %s33, %s41
      %s202 = ssub.s32 %s198, %s200
      %s203 = ssub.s32 %s199, %s201
      %s204 = sor.u32 %s202, %s203
      %p205 = scmp.eq.s32.totalorder %s204, 0
      %s207 = sadd.s32 %s206, 1
      %s208 = scalar_select %p205, %s206, %s207
      %p211 = pneg %p205
      %p212 = scmp.eq.s32.totalorder %s15, 3
      %p213 = por %p211, %p212
      %p214 = scmp.ne.s32.totalorder %s206, %s209
      %p215 = scmp.eq.s32.totalorder %s15, 0
      %p216 = por %p214, %p215
      %p217 = scmp.ne.s32.totalorder %s206, %s209
      %p218 = scmp.eq.s32.totalorder %s20, 3
      %p219 = por %p217, %p218
      %p220 = scmp.ne.s32.totalorder %s209, %s210
      %p221 = scmp.eq.s32.totalorder %s20, 0
      %p222 = por %p220, %p221
      %p223 = scmp.ne.s32.totalorder %s209, %s210
      %p224 = scmp.eq.s32.totalorder %s21, 3
      %p225 = por %p223, %p224
      %p227 = scmp.ne.s32.totalorder %s210, %s226
      %p228 = scmp.eq.s32.totalorder %s21, 0
      %p229 = por %p227, %p228
      %p230 = scmp.le.s32.totalorder 1, %s15
      %p231 = scmp.lt.s32.totalorder %s15, 5
      %p232 = pnand %p230, %p231
      %p233 = pneg %p232
      // Predicated region
      $region9: #{tpu_custom_call.1} parent=5 // pred_check
        _
      $region10: #{tpu_custom_call.1} parent=5 // pred_check_branch
        %235 = sbr.rel (%p232) target = $region12
      $region11: #{tpu_custom_call.1} parent=5 // pred_region
        %s236 = ssub.s32 %s15, 1
        // Predicated region
        $region13: #{tpu_custom_call.1} parent=11 // pred_check
          %p237 = pneg %p127
        $region14: #{tpu_custom_call.1} parent=11 // pred_check_branch
          %239 = sbr.rel (%p237) target = $region16
        $region15: #{tpu_custom_call.1} parent=11 // pred_region
          _
        $region16: #{tpu_custom_call.1} parent=11 // pred_fallthru
          _
        // Predicated region
        $region17: #{tpu_custom_call.1} parent=11 // pred_check
          %p240 = pneg %p148
        $region18: #{tpu_custom_call.1} parent=11 // pred_check_branch
          %242 = sbr.rel (%p240) target = $region20
        $region19: #{tpu_custom_call.1} parent=11 // pred_region
          _
        $region20: #{tpu_custom_call.1} parent=11 // pred_fallthru
          _
        // Predicated region
        $region21: #{tpu_custom_call.1} parent=11 // pred_check
          %p243 = pneg %p169
        $region22: #{tpu_custom_call.1} parent=11 // pred_check_branch
          %245 = sbr.rel (%p243) target = $region24
        $region23: #{tpu_custom_call.1} parent=11 // pred_region
          _
        $region24: #{tpu_custom_call.1} parent=11 // pred_fallthru
          _
        // Predicated region
        $region25: #{tpu_custom_call.1} parent=11 // pred_check
          %p246 = pneg %p190
        $region26: #{tpu_custom_call.1} parent=11 // pred_check_branch
          %248 = sbr.rel (%p246) target = $region28
        $region27: #{tpu_custom_call.1} parent=11 // pred_region
          _
        $region28: #{tpu_custom_call.1} parent=11 // pred_fallthru
          _
      $region12: #{tpu_custom_call.1} parent=5 // pred_fallthru
        _
      %p249 = scmp.lt.s32.totalorder %s15, 4
      // Predicated region
      $region29: #{tpu_custom_call.1} parent=5 // pred_check
        %p250 = pneg %p249
      $region30: #{tpu_custom_call.1} parent=5 // pred_check_branch
        %252 = sbr.rel (%p250) target = $region32
      $region31: #{tpu_custom_call.1} parent=5 // pred_region
        // Predicated region
        $region33: #{tpu_custom_call.1} parent=31 // pred_check
          %p253 = pneg %p64
        $region34: #{tpu_custom_call.1} parent=31 // pred_check_branch
          %255 = sbr.rel (%p253) target = $region36
        $region35: #{tpu_custom_call.1} parent=31 // pred_region
          %s256 = ssub.s32 1, %s22
          %s257 = smul.u32 %s23, %s256
          %s258 = sadd.s32 %s257, %s22
          %s259 = smul.u32 %s24, %s256
          %s260 = smul.u32 2, %s259
          %p261 = scmp.lt.s32.totalorder %s258, 1
          %s262 = scalar_select %p261, %s258, 1
          %p263 = scmp.lt.s32.totalorder %s260, 1
          %s264 = scalar_select %p263, %s260, 1
          %s265 = smul.addr %s262, 2
          %s266 = sadd.s32 %s264, %s265
          %s267 = smul.addr %s266, 4
          %s268 = scalar_lea.vmem %s0, %s267
          %s269 = ssub.s32 1, %s22
          %s270 = smul.u32 %s23, %s269
          %s271 = sadd.s32 %s270, %s22
          %s272 = smul.u32 %s24, %s269
          %s273 = smul.u32 2, %s272
        $region36: #{tpu_custom_call.1} parent=31 // pred_fallthru
          _
        // Predicated region
        $region37: #{tpu_custom_call.1} parent=31 // pred_check
          %p274 = pneg %p100
        $region38: #{tpu_custom_call.1} parent=31 // pred_check_branch
          %276 = sbr.rel (%p274) target = $region40
        $region39: #{tpu_custom_call.1} parent=31 // pred_region
          %s277 = ssub.s32 1, %s22
          %s278 = smul.u32 %s23, %s277
          %s279 = sadd.s32 %s278, %s22
          %s280 = smul.u32 %s24, %s277
          %s281 = smul.u32 2, %s280
          %p282 = scmp.lt.s32.totalorder %s279, 1
          %s283 = scalar_select %p282, %s279, 1
          %p284 = scmp.lt.s32.totalorder %s281, 1
          %s285 = scalar_select %p284, %s281, 1
          %s286 = smul.addr %s283, 2
          %s287 = sadd.s32 %s285, %s286
          %s288 = smul.addr %s287, 4
          %s289 = scalar_lea.vmem %s1, %s288
          %s290 = ssub.s32 1, %s22
          %s291 = smul.u32 %s23, %s290
          %s292 = sadd.s32 %s291, %s22
          %s293 = smul.u32 %s24, %s290
          %s294 = smul.u32 2, %s293
        $region40: #{tpu_custom_call.1} parent=31 // pred_fallthru
          _
      $region32: #{tpu_custom_call.1} parent=5 // pred_fallthru
        _
      %p295 = scmp.le.s32.totalorder 1, %s15
      %p296 = scmp.lt.s32.totalorder %s15, 5
      %p297 = pnand %p295, %p296
      %p298 = pneg %p297
      // Predicated region
      $region41: #{tpu_custom_call.1} parent=5 // pred_check
        _
      $region42: #{tpu_custom_call.1} parent=5 // pred_check_branch
        %300 = sbr.rel (%p297) target = $region44
      $region43: #{tpu_custom_call.1} parent=5 // pred_region
        %s301 = ssub.s32 %s15, 1
        %s302 = ssub.s32 1, %s25
        %s303 = smul.u32 %s26, %s302
        %s304 = sadd.s32 %s303, %s25
        %s305 = smul.u32 %s27, %s302
        %s306 = smul.u32 2, %s305
        %p307 = scmp.lt.s32.totalorder %s304, 1
        %s308 = scalar_select %p307, %s304, 1
        %p309 = scmp.lt.s32.totalorder %s306, 1
        %s310 = scalar_select %p309, %s306, 1
        %s311 = smul.addr %s308, 2
        %s312 = sadd.s32 %s310, %s311
        %s313 = smul.addr %s312, 4
        %s314 = scalar_lea.vmem %s0, %s313
        %p315 = pneg %p70
        %p316 = pneg %p67
        %s317 = ssub.s32 1, %s25
        %s318 = smul.u32 %s26, %s317
        %s319 = sadd.s32 %s318, %s25
        %s320 = smul.u32 %s27, %s317
        %s321 = smul.u32 2, %s320
        %p322 = scmp.lt.s32.totalorder %s319, 1
        %s323 = scalar_select %p322, %s319, 1
        %p324 = scmp.lt.s32.totalorder %s321, 1
        %s325 = scalar_select %p324, %s321, 1
        %s326 = smul.addr %s323, 2
        %s327 = sadd.s32 %s325, %s326
        %s328 = smul.addr %s327, 4
        %s329 = scalar_lea.vmem %s1, %s328
        %p330 = pneg %p106
        %p331 = pneg %p103
        %p332 = pneg %p127
        %p333 = pneg %p124
        %p334 = pneg %p148
        %p335 = pneg %p145
        %p336 = pneg %p169
        %p337 = pneg %p166
        %p338 = pneg %p190
        %p339 = pneg %p187
        %p340 = pneg %p222
        %p341 = pneg %p219
        %s342 = sand.u32 %s209, 1
        %s343 = scalar_lea.sflag [#allocation6], %s342
        %s344 = sand.u32 %s209, 1
        %s345 = smul.addr %s344, 16
        %s346 = scalar_lea.vmem [#allocation5], %s345
        %s347 = ssub.s32 1, %s25
        %s348 = smul.u32 %s26, %s347
        %s349 = sadd.s32 %s348, %s25
        %s350 = smul.u32 %s27, %s347
        %s351 = smul.u32 2, %s350
        %p352 = scmp.lt.s32.totalorder %s349, 1
        %s353 = scalar_select %p352, %s349, 1
        %p354 = scmp.lt.s32.totalorder %s351, 1
        %s355 = scalar_select %p354, %s351, 1
        %s356 = smul.addr %s353, 2
        %s357 = sadd.s32 %s355, %s356
        %s358 = smul.addr %s357, 4
        %s359 = scalar_lea.vmem %s0, %s358
        %s360 = ssub.s32 1, %s25
        %s361 = smul.u32 %s26, %s360
        %s362 = sadd.s32 %s361, %s25
        %s363 = smul.u32 %s27, %s360
        %s364 = smul.u32 2, %s363
        %s365 = ssub.s32 1, %s25
        %s366 = smul.u32 %s26, %s365
        %s367 = sadd.s32 %s366, %s25
        %s368 = smul.u32 %s27, %s365
        %s369 = smul.u32 2, %s368
        %p370 = scmp.lt.s32.totalorder %s367, 1
        %s371 = scalar_select %p370, %s367, 1
        %p372 = scmp.lt.s32.totalorder %s369, 1
        %s373 = scalar_select %p372, %s369, 1
        %s374 = smul.addr %s371, 2
        %s375 = sadd.s32 %s373, %s374
        %s376 = smul.addr %s375, 4
        %s377 = scalar_lea.vmem %s1, %s376
        %s378 = ssub.s32 1, %s25
        %s379 = smul.u32 %s26, %s378
        %s380 = sadd.s32 %s379, %s25
        %s381 = smul.u32 %s27, %s378
        %s382 = smul.u32 2, %s381
        %s383 = smul.u32 %s26, %s25
        %s384 = smul.u32 %s27, %s25
        %s385 = smul.u32 2, %s384
        %p386 = scmp.eq.s32.totalorder %s25, 0
        %p387 = scmp.eq.s32.totalorder %s26, 0
        %p388 = pnand %p386, %p387
        %p389 = pneg %p388
        %p390 = scmp.eq.s32.totalorder %s27, 0
        %p391 = pnand %p389, %p390
        %p392 = pneg %p391
        // Predicated region
        $region45: #{tpu_custom_call.1} parent=43 // pred_check
          _
        $region46: #{tpu_custom_call.1} parent=43 // pred_check_branch
          %394 = sbr.rel (%p391) target = $region48
        $region47: #{tpu_custom_call.1} parent=43 // pred_region
          %vm395 = vcmask 7168
          %396 = vst.msk [vmem:[#allocation3] sm:$0xff] %vm395, 0.0
          %397 = vst.msk [vmem:[#allocation4] sm:$0xff] %vm395, 0.0
        $region48: #{tpu_custom_call.1} parent=43 // pred_fallthru
          _
        // Predicated region
        $region49: #{tpu_custom_call.1} parent=43 // pred_check
          %p398 = pneg %p386
        $region50: #{tpu_custom_call.1} parent=43 // pred_check_branch
          %400 = sbr.rel (%p398) target = $region52
        $region51: #{tpu_custom_call.1} parent=43 // pred_region
          %v401 = vld [vmem:[%s2] sm:$0xff]
          %v402 = vld [vmem:[%s359] sm:$0xff]
          %v403 = vld [vmem:[%s3] sm:$0xff]
          %v404 = vld [vmem:[%s377] sm:$0xff]
          %v406 = vcombine.high %v404, %v404
          %vm407 = vcmask 31744
          %v409 = vsel %vm407, %v403, 0
          %vm411 = vcmask 1043456
          %v412 = vsel %vm411, %v404, 0
          %v414 = vsel %vm411, %v406, 0
          %416 = vmatprep.subr.mxu0 %v414
          %417 = vmatpush1.msra.mxu0 %v412
          %418 = vmatprep.subr.mxu0 0.0
          %419 = vmatpush1.msra.mxu0 0.0
          %420 = vmatprep.subr.mxu0 0.0
          %421 = vmatpush1.msra.mxu0 0.0
          %422 = vmatprep.subr.mxu0 0.0
          %423 = vmatpush1.msra.mxu0 0.0
          %424 = vmatprep.subr.mxu0 0.0
          %425 = vmatpush1.msra.mxu0 0.0
          %426 = vmatprep.subr.mxu0 0.0
          %427 = vmatpush1.msra.mxu0 0.0
          %428 = vmatprep.subr.mxu0 0.0
          %429 = vmatpush1.msra.mxu0 0.0
          %430 = vmatprep.subr.mxu0 0.0
          %431 = vmatpush1.msra.mxu0 0.0
          %432 = vmatprep.subr.mxu0 0.0
          %433 = vmatpush1.msra.mxu0 0.0
          %434 = vmatprep.subr.mxu0 0.0
          %435 = vmatpush1.msra.mxu0 0.0
          %436 = vmatprep.subr.mxu0 0.0
          %437 = vmatpush1.msra.mxu0 0.0
          %438 = vmatprep.subr.mxu0 0.0
          %439 = vmatpush1.msra.mxu0 0.0
          %440 = vmatprep.subr.mxu0 0.0
          %441 = vmatpush1.msra.mxu0 0.0
          %442 = vmatprep.subr.mxu0 0.0
          %443 = vmatpush1.msra.mxu0 0.0
          %444 = vmatprep.subr.mxu0 0.0
          %445 = vmatpush1.msra.mxu0 0.0
          %446 = vmatprep.subr.mxu0 0.0
          %447 = vmatpush1.msra.mxu0 0.0
          %448 = vmatprep.subr.mxu0 0.0
          %449 = vmatpush1.msra.mxu0 0.0
          %450 = vmatprep.subr.mxu0 0.0
          %451 = vmatpush1.msra.mxu0 0.0
          %452 = vmatprep.subr.mxu0 0.0
          %453 = vmatpush1.msra.mxu0 0.0
          %454 = vmatprep.subr.mxu0 0.0
          %455 = vmatpush1.msra.mxu0 0.0
          %456 = vmatprep.subr.mxu0 0.0
          %457 = vmatpush1.msra.mxu0 0.0
          %458 = vmatprep.subr.mxu0 0.0
          %459 = vmatpush1.msra.mxu0 0.0
          %460 = vmatprep.subr.mxu0 0.0
          %461 = vmatpush1.msra.mxu0 0.0
          %462 = vmatprep.subr.mxu0 0.0
          %463 = vmatpush1.msra.mxu0 0.0
          %464 = vmatprep.subr.mxu0 0.0
          %465 = vmatpush1.msra.mxu0 0.0
          %466 = vmatprep.subr.mxu0 0.0
          %467 = vmatpush1.msra.mxu0 0.0
          %468 = vmatprep.subr.mxu0 0.0
          %469 = vmatpush1.msra.mxu0 0.0
          %470 = vmatprep.subr.mxu0 0.0
          %471 = vmatpush1.msra.mxu0 0.0
          %472 = vmatprep.subr.mxu0 0.0
          %473 = vmatpush1.msra.mxu0 0.0
          %474 = vmatprep.subr.mxu0 0.0
          %475 = vmatpush1.msra.mxu0 0.0
          %476 = vmatprep.subr.mxu0 0.0
          %477 = vmatpush1.msra.mxu0 0.0
          %478 = vmatprep.subr.mxu0 0.0
          %479 = vmatpush1.msra.mxu0 0.0
          %480 = vmatprep.mubr.f32.mxu0 0.0
          %481 = vmatmul.mubr.f32.gmra.mrb[0].mxu0 %v409
          %v482 = vpop.f32.mrb[0].mxu0
          %v483 = vadd.f32 0.0, %v482
          %v484 = vpop.f32.mrb[0].mxu0
          %v485 = vadd.f32 0.0, %v484
          %486 = vdwg.mxu0
          %v488 = vcombine.high %v402, %v402
          %v490 = vsel %vm407, %v401, 0
          %v492 = vsel %vm411, %v402, 0
          %v494 = vsel %vm411, %v488, 0
          %496 = vmatprep.subr.mxu0 %v494
          %497 = vmatpush1.msra.mxu0 %v492
          %498 = vmatprep.subr.mxu0 0.0
          %499 = vmatpush1.msra.mxu0 0.0
          %500 = vmatprep.subr.mxu0 0.0
          %501 = vmatpush1.msra.mxu0 0.0
          %502 = vmatprep.subr.mxu0 0.0
          %503 = vmatpush1.msra.mxu0 0.0
          %504 = vmatprep.subr.mxu0 0.0
          %505 = vmatpush1.msra.mxu0 0.0
          %506 = vmatprep.subr.mxu0 0.0
          %507 = vmatpush1.msra.mxu0 0.0
          %508 = vmatprep.subr.mxu0 0.0
          %509 = vmatpush1.msra.mxu0 0.0
          %510 = vmatprep.subr.mxu0 0.0
          %511 = vmatpush1.msra.mxu0 0.0
          %512 = vmatprep.subr.mxu0 0.0
          %513 = vmatpush1.msra.mxu0 0.0
          %514 = vmatprep.subr.mxu0 0.0
          %515 = vmatpush1.msra.mxu0 0.0
          %516 = vmatprep.subr.mxu0 0.0
          %517 = vmatpush1.msra.mxu0 0.0
          %518 = vmatprep.subr.mxu0 0.0
          %519 = vmatpush1.msra.mxu0 0.0
          %520 = vmatprep.subr.mxu0 0.0
          %521 = vmatpush1.msra.mxu0 0.0
          %522 = vmatprep.subr.mxu0 0.0
          %523 = vmatpush1.msra.mxu0 0.0
          %524 = vmatprep.subr.mxu0 0.0
          %525 = vmatpush1.msra.mxu0 0.0
          %526 = vmatprep.subr.mxu0 0.0
          %527 = vmatpush1.msra.mxu0 0.0
          %528 = vmatprep.subr.mxu0 0.0
          %529 = vmatpush1.msra.mxu0 0.0
          %530 = vmatprep.subr.mxu0 0.0
          %531 = vmatpush1.msra.mxu0 0.0
          %532 = vmatprep.subr.mxu0 0.0
          %533 = vmatpush1.msra.mxu0 0.0
          %534 = vmatprep.subr.mxu0 0.0
          %535 = vmatpush1.msra.mxu0 0.0
          %536 = vmatprep.subr.mxu0 0.0
          %537 = vmatpush1.msra.mxu0 0.0
          %538 = vmatprep.subr.mxu0 0.0
          %539 = vmatpush1.msra.mxu0 0.0
          %540 = vmatprep.subr.mxu0 0.0
          %541 = vmatpush1.msra.mxu0 0.0
          %542 = vmatprep.subr.mxu0 0.0
          %543 = vmatpush1.msra.mxu0 0.0
          %544 = vmatprep.subr.mxu0 0.0
          %545 = vmatpush1.msra.mxu0 0.0
          %546 = vmatprep.subr.mxu0 0.0
          %547 = vmatpush1.msra.mxu0 0.0
          %548 = vmatprep.subr.mxu0 0.0
          %549 = vmatpush1.msra.mxu0 0.0
          %550 = vmatprep.subr.mxu0 0.0
          %551 = vmatpush1.msra.mxu0 0.0
          %552 = vmatprep.subr.mxu0 0.0
          %553 = vmatpush1.msra.mxu0 0.0
          %554 = vmatprep.subr.mxu0 0.0
          %555 = vmatpush1.msra.mxu0 0.0
          %556 = vmatprep.subr.mxu0 0.0
          %557 = vmatpush1.msra.mxu0 0.0
          %558 = vmatprep.subr.mxu0 0.0
          %559 = vmatpush1.msra.mxu0 0.0
          %560 = vmatprep.mubr.f32.mxu0 0.0
          %561 = vmatmul.mubr.f32.gmra.mrb[0].mxu0 %v490
          %v562 = vpop.f32.mrb[0].mxu0
          %v563 = vadd.f32 %v483, %v562
          %v564 = vpop.f32.mrb[0].mxu0
          %v565 = vadd.f32 %v485, %v564
          %566 = vdwg.mxu0
          %v567 = vld [vmem:[%s4] sm:$0xff]
          %569 = vset.pattern.permute.xlu0 0
          %570 = vperm.xlu0 %569, %v567
          %v571 = vpop.permute.xlu0 %570
          %v573 = vadd.f32 %v563, %v571
          %v574 = vadd.f32 %v565, %v571
          %s575 = smul.u32 %s27, 2
          %s576 = smul.u32 %s26, 2
          %s577 = sadd.s32 %s575, %s576
          %s578 = smul.addr %s577, 8
          %s579 = scalar_lea.vmem [#allocation2], %s578
          %580 = vst [vmem:[%s579] sm:$0xff] %v573
          %581 = vst [vmem:[%s579 + $0x8] sm:$0xff] %v574
          %v582 = vld [vmem:[#allocation3] sm:$0xff]
          %v583 = vadd.f32 %v573, %v574
          %584 = vadd.xlane.f32.xlu0 %v583
          %v585 = vpop.xlane.xlu0 %584
          %v586 = vadd.f32 %v582, %v585
          %vm587 = vcmask 7168
          %588 = vst.msk [vmem:[#allocation3] sm:$0xff] %vm587, %v586
          %v589 = vld [vmem:[#allocation4] sm:$0xff]
          %v590 = vmul.f32 %v573, %v573
          %v591 = vmul.f32 %v574, %v574
          %v592 = vadd.f32 %v590, %v591
          %593 = vadd.xlane.f32.xlu0 %v592
          %v594 = vpop.xlane.xlu0 %593
          %v595 = vadd.f32 %v589, %v594
          %596 = vst.msk [vmem:[#allocation4] sm:$0xff] %vm587, %v595
        $region52: #{tpu_custom_call.1} parent=43 // pred_fallthru
          _
        %p597 = scmp.eq.s32.totalorder %s25, 1
        // Predicated region
        $region53: #{tpu_custom_call.1} parent=43 // pred_check
          %p598 = pneg %p597
        $region54: #{tpu_custom_call.1} parent=43 // pred_check_branch
          %600 = sbr.rel (%p598) target = $region56
        $region55: #{tpu_custom_call.1} parent=43 // pred_region
          %v601 = vld [vmem:[#allocation3] sm:$0xff]
          %v602 = vmul.f32 %v601, 0.001953125
          %v603 = vld [vmem:[#allocation4] sm:$0xff]
          %v604 = vmul.f32 %v603, 0.001953125
          %v605 = vmul.f32 %v602, %v602
          %v606 = vsub.f32 %v604, %v605
          %v607 = vld [vmem:[%s5] sm:$0xff]
          %v608 = vadd.f32 %v606, 1e-05
          %v609 = vrsqrt.pop %v608
          %v610 = vmul.f32 %v607, %v609
          %s611 = scalar_lea.vmem %s5, 8
          %v612 = vld [vmem:[%s611] sm:$0xff]
          %v613 = vmul.f32 %v602, %v610
          %v614 = vsub.f32 %v612, %v613
          %s615 = smul.u32 %s27, 2
          %s616 = smul.u32 %s26, 2
          %s617 = sadd.s32 %s615, %s616
          %s618 = smul.addr %s617, 8
          %s619 = scalar_lea.vmem [#allocation2], %s618
          %v620 = vld [vmem:[%s619] sm:$0xff]
          %v621 = vld [vmem:[%s619 + $0x8] sm:$0xff]
          %623 = vset.pattern.permute.xlu0 0
          %624 = vperm.xlu0 %623, %v610
          %v625 = vpop.permute.xlu0 %624
          %v627 = vmul.f32 %v620, %v625
          %v628 = vmul.f32 %v621, %v625
          %630 = vset.pattern.permute.xlu0 0
          %631 = vperm.xlu0 %630, %v614
          %v632 = vpop.permute.xlu0 %631
          %v634 = vadd.f32 %v627, %v632
          %v635 = vadd.f32 %v628, %v632
          %v636 = vmax.f32 %v634, 0.0
          %v637 = vmax.f32 %v635, 0.0
          %638 = vst [vmem:[%s346] sm:$0xff] %v636
          %639 = vst [vmem:[%s346 + $0x8] sm:$0xff] %v637
        $region56: #{tpu_custom_call.1} parent=43 // pred_fallthru
          _
        %s640 = sand.u32 %s209, 1
        %s641 = scalar_lea.sflag [#allocation6], %s640
        %s642 = sand.u32 %s209, 1
        %s643 = smul.addr %s642, 16
        %s644 = scalar_lea.vmem [#allocation5], %s643
        // Predicated region
        $region57: #{tpu_custom_call.1} parent=43 // pred_check
          %p645 = pneg %p219
        $region58: #{tpu_custom_call.1} parent=43 // pred_check_branch
          %647 = sbr.rel (%p645) target = $region60
        $region59: #{tpu_custom_call.1} parent=43 // pred_region
          %s648 = smul.u32 %s26, %s25
          %s649 = smul.u32 %s27, %s25
          %s650 = smul.u32 2, %s649
          %s652 = ssub.s32 256, 256
          %653 = vsyncadd %s641, %s652
          %s654 = smul.addr %s648, 2
          %s655 = sadd.s32 %s650, %s654
          %s656 = smul.addr %s655, 128
          %s657 = scalar_lea.hbm %s6, %s656
          %s659 = sshll.u32 %s644, 4
          %s660 = int_to_ptr.vmem [resolvable:$true] %s659
          %662 = dma.vmem_to_hbm [thread:$0]  %s660, 256, %s657, %s641
        $region60: #{tpu_custom_call.1} parent=43 // pred_fallthru
          _
      $region44: #{tpu_custom_call.1} parent=5 // pred_fallthru
        _
      %p663 = scmp.le.s32.totalorder 2, %s15
      // Predicated region
      $region61: #{tpu_custom_call.1} parent=5 // pred_check
        %p664 = pneg %p663
      $region62: #{tpu_custom_call.1} parent=5 // pred_check_branch
        %666 = sbr.rel (%p664) target = $region64
      $region63: #{tpu_custom_call.1} parent=5 // pred_region
        %s667 = ssub.s32 %s15, 2
        // Predicated region
        $region65: #{tpu_custom_call.1} parent=63 // pred_check
          %p668 = pneg %p225
        $region66: #{tpu_custom_call.1} parent=63 // pred_check_branch
          %670 = sbr.rel (%p668) target = $region68
        $region67: #{tpu_custom_call.1} parent=63 // pred_region
          %s671 = sand.u32 %s210, 1
          %s672 = scalar_lea.sflag [#allocation6], %s671
          %s673 = sand.u32 %s210, 1
          %s674 = smul.addr %s673, 16
          %s675 = scalar_lea.vmem [#allocation5], %s674
          %676 = dma.done %s672, 256
        $region68: #{tpu_custom_call.1} parent=63 // pred_fallthru
          _
      $region64: #{tpu_custom_call.1} parent=5 // pred_fallthru
        _
    $region6: #{tpu_custom_call.1} parent=1 // loop_footer
      %s19 = sadd.s32 1, %s15
    $region7: #{tpu_custom_call.1} parent=1 // loop_footer_branch
      %14 = sbr.rel target = $region3
    $region8: #{tpu_custom_call.1} parent=1 // loop_exit
      _
    %677 = vsyncpa [#allocation6], 1
    %s678 = scalar_lea.sflag [#allocation6], 1
    %679 = vsyncpa %s678, 1

</llo_original>
